<compile_context>
chip_gen: v7x
topology: tpu7x:2x2x1
jax: 0.10.0
libtpu: 0.0.40
codegen_flags: <defaults>
</compile_context>

<pallas_src>
import functools

import jax
import jax.numpy as jnp
import numpy as np
from jax import lax
from jax.experimental import pallas as pl
from jax.experimental.pallas import tpu as pltpu


# ----------------------------- fused Pallas kernel ---------------------------

def _fused_forward_kernel(x_ref, wih_ref, whh_ref, b_ref, wlin_ref,
                          out_ref, pre_sc):
    """LSTM layer-0 recurrence + no-bias linear head for one batch block.

    x_ref:    (T*8, D)   time-major rows of this batch block (row = t*8 + b)
    wih_ref:  (D, 4H)    W_ih^T   (PyTorch gate order i, f, g, o)
    whh_ref:  (H, 4H)    W_hh^T
    b_ref:    (1, 4H)    b_ih + b_hh
    wlin_ref: (1, H)     linear weight row (no bias)
    out_ref:  (8, 128)   lane-broadcast scalar prediction per batch row
    pre_sc:   (T*8, 4H)  VMEM scratch holding the hoisted pre-gates
    """
    TB, _ = x_ref.shape
    H = whh_ref.shape[0]
    B = out_ref.shape[0]          # 8 (sublane granule)
    T = TB // B

    # Hoisted input projection + bias: one MXU matmul for all timesteps.
    pre_sc[...] = (jnp.dot(x_ref[...], wih_ref[...],
                           preferred_element_type=jnp.float32)
                   + b_ref[...])

    # Lane mask picking the tanh ('g') gate chunk so the nonlinearities stay
    # whole-vreg EUP ops (computed once, loop-invariant).
    lane = lax.broadcasted_iota(jnp.int32, (B, 4 * H), 1)
    g_mask = (lane >= 2 * H) & (lane < 3 * H)

    whh = whh_ref[...]            # loop-invariant recurrent weight, hoisted

    def step(t, carry):
        h, c = carry
        row = pl.multiple_of(t * B, 8)                       # sublane-aligned
        gates = pre_sc[pl.ds(row, B), :] + jnp.dot(
            h, whh, preferred_element_type=jnp.float32)      # (B, 4H)
        sig = jax.nn.sigmoid(gates)                          # whole-vreg EUP
        tnh = jnp.tanh(gates)                                # whole-vreg EUP
        act = jnp.where(g_mask, tnh, sig)                    # one select
        i = act[:, 0 * H:1 * H]
        f = act[:, 1 * H:2 * H]
        g = act[:, 2 * H:3 * H]
        o = act[:, 3 * H:4 * H]
        c_new = f * c + i * g
        h_new = o * jnp.tanh(c_new)
        return h_new, c_new

    zeros = jnp.zeros((B, H), jnp.float32)
    h_fin, _ = lax.fori_loop(0, T, step, (zeros, zeros), unroll=True)

    # Fused no-bias linear head: multiply + lane reduction (XLU), then
    # lane-broadcast so the single output store is lane-dense (unmasked vst).
    red = jnp.sum(h_fin * wlin_ref[...], axis=-1, keepdims=True)   # (B, 1)
    out_ref[...] = jnp.broadcast_to(red, out_ref.shape)


# ------------------------------- JAX wrapper ---------------------------------

def shallow_regression_lstm_forward(x, params, num_layers, hidden):
    """x: (batch, seq, num_sensors) float32 -> (batch,) float32.

    The module computes out = linear(hn[0]); only layer 0's recurrence can
    reach the output, so deeper LSTM layers are dead code and skipped here
    (the reference below runs the full stack and matches exactly).
    """
    del num_layers
    batch, seq, d = x.shape
    w_ih_t, w_hh_t, bias = params["lstm"][0]
    w_lin_row = jnp.transpose(params["linear_w_t"])          # (1, H)

    blk = 8                                                  # sublane granule
    b_pad = -(-batch // blk) * blk
    n_blk = b_pad // blk

    # (batch, T, D) -> (n_blk, T*8, D); row within a block = t*8 + local_b.
    x_tm = jnp.transpose(x, (1, 0, 2))                       # (T, batch, D)
    x_tm = jnp.pad(x_tm, ((0, 0), (0, b_pad - batch), (0, 0)))
    x_blk = x_tm.reshape(seq, n_blk, blk, d).transpose(1, 0, 2, 3)
    x_blk = x_blk.reshape(n_blk, seq * blk, d)

    out = pl.pallas_call(
        _fused_forward_kernel,
        out_shape=jax.ShapeDtypeStruct((b_pad, 128), jnp.float32),
        grid=(n_blk,),
        in_specs=[
            pl.BlockSpec((None, seq * blk, d), lambda i: (i, 0, 0)),
            pl.BlockSpec((d, 4 * hidden), lambda i: (0, 0)),
            pl.BlockSpec((hidden, 4 * hidden), lambda i: (0, 0)),
            pl.BlockSpec((1, 4 * hidden), lambda i: (0, 0)),
            pl.BlockSpec((1, hidden), lambda i: (0, 0)),
        ],
        out_specs=pl.BlockSpec((blk, 128), lambda i: (i, 0)),
        scratch_shapes=[pltpu.VMEM((seq * blk, 4 * hidden), jnp.float32)],
        compiler_params=pltpu.CompilerParams(
            dimension_semantics=("parallel",)),
    )(x_blk, w_ih_t, w_hh_t, bias, w_lin_row)

    return out[:batch, 0]                                    # == .flatten()


# ------------------------- deterministic parameters --------------------------

def init_params(key, num_sensors, hidden, num_layers):
    # Matches PyTorch init distribution U(-1/sqrt(H), 1/sqrt(H)); deterministic.
    k = float(1.0 / np.sqrt(hidden))
    keys = jax.random.split(key, num_layers * 4 + 1)
    lstm_params = []
    idx = 0
    for layer in range(num_layers):
        d_in = num_sensors if layer == 0 else hidden
        w_ih = jax.random.uniform(keys[idx], (4 * hidden, d_in), jnp.float32, -k, k); idx += 1
        w_hh = jax.random.uniform(keys[idx], (4 * hidden, hidden), jnp.float32, -k, k); idx += 1
        b_ih = jax.random.uniform(keys[idx], (4 * hidden,), jnp.float32, -k, k); idx += 1
        b_hh = jax.random.uniform(keys[idx], (4 * hidden,), jnp.float32, -k, k); idx += 1
        lstm_params.append((w_ih.T, w_hh.T, (b_ih + b_hh).reshape(1, -1)))
    w_lin = jax.random.uniform(keys[idx], (1, hidden), jnp.float32, -k, k)
    return {"lstm": lstm_params, "linear_w_t": w_lin.T}


# ------------------------------ pure-JAX reference ---------------------------

def reference_forward(x, params, num_layers, hidden):
    """Runs the FULL num_layers stack (like nn.LSTM) and uses hn[0]."""
    B = x.shape[0]
    inp = jnp.transpose(x, (1, 0, 2))
    hn0 = None
    for layer in range(num_layers):
        w_ih_t, w_hh_t, b = params["lstm"][layer]

        def step(carry, x_t, w_ih_t=w_ih_t, w_hh_t=w_hh_t, b=b):
            h, c = carry
            gates = x_t @ w_ih_t + h @ w_hh_t + b
            i, f, g, o = jnp.split(gates, 4, axis=-1)
            c = jax.nn.sigmoid(f) * c + jax.nn.sigmoid(i) * jnp.tanh(g)
            h = jax.nn.sigmoid(o) * jnp.tanh(c)
            return (h, c), h

        init = (jnp.zeros((B, hidden), jnp.float32),
                jnp.zeros((B, hidden), jnp.float32))
        (h_final, _), hseq = lax.scan(step, init, inp)
        if layer == 0:
            hn0 = h_final
        inp = hseq
    return (hn0 @ params["linear_w_t"]).reshape(-1)


# ----------------------------------- main -------------------------------------

if __name__ == "__main__":
    num_sensors, hidden_units, num_layers = 4, 32, 2
    batch, seq = 2, 8

    key = jax.random.PRNGKey(0)
    kx, kp = jax.random.split(key)
    x = jax.random.normal(kx, (batch, seq, num_sensors), jnp.float32)
    params = init_params(kp, num_sensors, hidden_units, num_layers)

    fwd = functools.partial(shallow_regression_lstm_forward,
                            num_layers=num_layers, hidden=hidden_units)
    out = jax.jit(fwd)(x, params)
    out = jax.block_until_ready(out)

    ref = reference_forward(x, params, num_layers, hidden_units)
    np.testing.assert_allclose(np.asarray(out), np.asarray(ref),
                               rtol=1e-5, atol=1e-5)
    assert out.shape == (batch,)
    print("KERNEL_OK")
</pallas_src>

<mosaic_0001>
module attributes {stable_mosaic.version = 11 : i64} {
  func.func @_fused_forward_kernel(%arg0: i32, %arg1: memref<1x64x4xf32, #tpu.memory_space<vmem>>, %arg2: memref<4x128xf32, #tpu.memory_space<vmem>>, %arg3: memref<32x128xf32, #tpu.memory_space<vmem>>, %arg4: memref<1x128xf32, #tpu.memory_space<vmem>>, %arg5: memref<1x32xf32, #tpu.memory_space<vmem>>, %arg6: memref<8x128xf32, #tpu.memory_space<vmem>>, %arg7: memref<64x128xf32, #tpu.memory_space<vmem>>) attributes {dimension_semantics = [#tpu.dimension_semantics<parallel>], iteration_bounds = array<i64: 1>, scalar_prefetch = 0 : i64, scratch_operands = 1 : i64, tpu.core_type = #tpu.core_type<tc>, window_params = [{transform_indices = @transform_0, window_bounds = array<i64: 1, 64, 4>}, {pipeline_mode = #tpu.pipeline_mode<synchronous>, transform_indices = @transform_1, window_bounds = array<i64: 4, 128>}, {pipeline_mode = #tpu.pipeline_mode<synchronous>, transform_indices = @transform_2, window_bounds = array<i64: 32, 128>}, {pipeline_mode = #tpu.pipeline_mode<synchronous>, transform_indices = @transform_3, window_bounds = array<i64: 1, 128>}, {pipeline_mode = #tpu.pipeline_mode<synchronous>, transform_indices = @transform_4, window_bounds = array<i64: 1, 32>}, {transform_indices = @transform_5, window_bounds = array<i64: 8, 128>}]} {
    %c0 = arith.constant 0 : index
    %c0_0 = arith.constant 0 : index
    %c0_1 = arith.constant 0 : index
    %0 = vector.load %arg1[%c0, %c0_0, %c0_1] : memref<1x64x4xf32, #tpu.memory_space<vmem>>, vector<1x64x4xf32>
    %1 = vector.shape_cast %0 : vector<1x64x4xf32> to vector<64x4xf32>
    %c0_2 = arith.constant 0 : index
    %c0_3 = arith.constant 0 : index
    %2 = vector.load %arg2[%c0_2, %c0_3] : memref<4x128xf32, #tpu.memory_space<vmem>>, vector<4x128xf32>
    %cst = arith.constant dense<0.000000e+00> : vector<64x128xf32>
    %3 = tpu.matmul %1, %2, %cst {dimension_numbers = #tpu.dot_dimension_numbers<[1], [0], [0], [1], [0, 0, 1, 1], [], []>} : vector<64x4xf32>, vector<4x128xf32>, vector<64x128xf32> -> vector<64x128xf32>
    %c0_4 = arith.constant 0 : index
    %c0_5 = arith.constant 0 : index
    %4 = vector.load %arg4[%c0_4, %c0_5] : memref<1x128xf32, #tpu.memory_space<vmem>>, vector<1x128xf32>
    %5 = vector.broadcast %4 : vector<1x128xf32> to vector<64x128xf32>
    %6 = arith.addf %3, %5 : vector<64x128xf32>
    %c0_6 = arith.constant 0 : index
    %c0_7 = arith.constant 0 : index
    %7 = vector.load %arg7[%c0_6, %c0_7] : memref<64x128xf32, #tpu.memory_space<vmem>>, vector<64x128xf32>
    tpu.vector_store %arg7[%c0_6, %c0_7], %6 {strides = array<i32>} : memref<64x128xf32, #tpu.memory_space<vmem>>, vector<64x128xf32>,
    %8 = tpu.iota {dimensions = array<i32: 1>} : vector<8x128xi32>
    %c64_i32 = arith.constant 64 : i32
    %9 = vector.broadcast %c64_i32 : i32 to vector<8x128xi32>
    %10 = arith.cmpi sge, %8, %9 : vector<8x128xi32>
    %c96_i32 = arith.constant 96 : i32
    %11 = vector.broadcast %c96_i32 : i32 to vector<8x128xi32>
    %12 = arith.cmpi slt, %8, %11 : vector<8x128xi32>
    %13 = arith.andi %10, %12 : vector<8x128xi1>
    %c0_8 = arith.constant 0 : index
    %c0_9 = arith.constant 0 : index
    %14 = vector.load %arg3[%c0_8, %c0_9] : memref<32x128xf32, #tpu.memory_space<vmem>>, vector<32x128xf32>
    %cst_10 = arith.constant 0.000000e+00 : f32
    %15 = vector.broadcast %cst_10 : f32 to vector<8x32xf32>
    %c0_i32 = arith.constant 0 : i32
    %c8_i32 = arith.constant 8 : i32
    %16 = arith.muli %c0_i32, %c8_i32 : i32
    %17 = tpu.assume_multiple %16, 8 : i32
    %18 = arith.index_cast %17 : i32 to index
    %c0_11 = arith.constant 0 : index
    %19 = vector.load %arg7[%18, %c0_11] : memref<64x128xf32, #tpu.memory_space<vmem>>, vector<8x128xf32>
    %cst_12 = arith.constant dense<0.000000e+00> : vector<8x128xf32>
    %20 = tpu.matmul %15, %14, %cst_12 {dimension_numbers = #tpu.dot_dimension_numbers<[1], [0], [0], [1], [0, 0, 1, 1], [], []>} : vector<8x32xf32>, vector<32x128xf32>, vector<8x128xf32> -> vector<8x128xf32>
    %21 = arith.addf %19, %20 : vector<8x128xf32>
    %22 = arith.negf %21 : vector<8x128xf32>
    %23 = math.exp %22 : vector<8x128xf32>
    %cst_13 = arith.constant 1.000000e+00 : f32
    %24 = vector.broadcast %cst_13 : f32 to vector<8x128xf32>
    %25 = arith.addf %24, %23 : vector<8x128xf32>
    %26 = arith.divf %24, %25 : vector<8x128xf32>
    %27 = math.tanh %21 : vector<8x128xf32>
    %28 = arith.select %13, %27, %26 : vector<8x128xi1>, vector<8x128xf32>
    %29 = vector.extract_strided_slice %28 {offsets = [0, 0], sizes = [8, 32], strides = [1, 1]} : vector<8x128xf32> to vector<8x32xf32>
    %30 = vector.extract_strided_slice %28 {offsets = [0, 32], sizes = [8, 32], strides = [1, 1]} : vector<8x128xf32> to vector<8x32xf32>
    %31 = vector.extract_strided_slice %28 {offsets = [0, 64], sizes = [8, 32], strides = [1, 1]} : vector<8x128xf32> to vector<8x32xf32>
    %32 = vector.extract_strided_slice %28 {offsets = [0, 96], sizes = [8, 32], strides = [1, 1]} : vector<8x128xf32> to vector<8x32xf32>
    %33 = arith.mulf %30, %15 : vector<8x32xf32>
    %34 = arith.mulf %29, %31 : vector<8x32xf32>
    %35 = arith.addf %33, %34 : vector<8x32xf32>
    %36 = math.tanh %35 : vector<8x32xf32>
    %37 = arith.mulf %32, %36 : vector<8x32xf32>
    %c1_i32 = arith.constant 1 : i32
    %c8_i32_14 = arith.constant 8 : i32
    %38 = arith.muli %c1_i32, %c8_i32_14 : i32
    %39 = tpu.assume_multiple %38, 8 : i32
    %40 = arith.index_cast %39 : i32 to index
    %c0_15 = arith.constant 0 : index
    %41 = vector.load %arg7[%40, %c0_15] : memref<64x128xf32, #tpu.memory_space<vmem>>, vector<8x128xf32>
    %cst_16 = arith.constant dense<0.000000e+00> : vector<8x128xf32>
    %42 = tpu.matmul %37, %14, %cst_16 {dimension_numbers = #tpu.dot_dimension_numbers<[1], [0], [0], [1], [0, 0, 1, 1], [], []>} : vector<8x32xf32>, vector<32x128xf32>, vector<8x128xf32> -> vector<8x128xf32>
    %43 = arith.addf %41, %42 : vector<8x128xf32>
    %44 = arith.negf %43 : vector<8x128xf32>
    %45 = math.exp %44 : vector<8x128xf32>
    %cst_17 = arith.constant 1.000000e+00 : f32
    %46 = vector.broadcast %cst_17 : f32 to vector<8x128xf32>
    %47 = arith.addf %46, %45 : vector<8x128xf32>
    %48 = arith.divf %46, %47 : vector<8x128xf32>
    %49 = math.tanh %43 : vector<8x128xf32>
    %50 = arith.select %13, %49, %48 : vector<8x128xi1>, vector<8x128xf32>
    %51 = vector.extract_strided_slice %50 {offsets = [0, 0], sizes = [8, 32], strides = [1, 1]} : vector<8x128xf32> to vector<8x32xf32>
    %52 = vector.extract_strided_slice %50 {offsets = [0, 32], sizes = [8, 32], strides = [1, 1]} : vector<8x128xf32> to vector<8x32xf32>
    %53 = vector.extract_strided_slice %50 {offsets = [0, 64], sizes = [8, 32], strides = [1, 1]} : vector<8x128xf32> to vector<8x32xf32>
    %54 = vector.extract_strided_slice %50 {offsets = [0, 96], sizes = [8, 32], strides = [1, 1]} : vector<8x128xf32> to vector<8x32xf32>
    %55 = arith.mulf %52, %35 : vector<8x32xf32>
    %56 = arith.mulf %51, %53 : vector<8x32xf32>
    %57 = arith.addf %55, %56 : vector<8x32xf32>
    %58 = math.tanh %57 : vector<8x32xf32>
    %59 = arith.mulf %54, %58 : vector<8x32xf32>
    %c2_i32 = arith.constant 2 : i32
    %c8_i32_18 = arith.constant 8 : i32
    %60 = arith.muli %c2_i32, %c8_i32_18 : i32
    %61 = tpu.assume_multiple %60, 8 : i32
    %62 = arith.index_cast %61 : i32 to index
    %c0_19 = arith.constant 0 : index
    %63 = vector.load %arg7[%62, %c0_19] : memref<64x128xf32, #tpu.memory_space<vmem>>, vector<8x128xf32>
    %cst_20 = arith.constant dense<0.000000e+00> : vector<8x128xf32>
    %64 = tpu.matmul %59, %14, %cst_20 {dimension_numbers = #tpu.dot_dimension_numbers<[1], [0], [0], [1], [0, 0, 1, 1], [], []>} : vector<8x32xf32>, vector<32x128xf32>, vector<8x128xf32> -> vector<8x128xf32>
    %65 = arith.addf %63, %64 : vector<8x128xf32>
    %66 = arith.negf %65 : vector<8x128xf32>
    %67 = math.exp %66 : vector<8x128xf32>
    %cst_21 = arith.constant 1.000000e+00 : f32
    %68 = vector.broadcast %cst_21 : f32 to vector<8x128xf32>
    %69 = arith.addf %68, %67 : vector<8x128xf32>
    %70 = arith.divf %68, %69 : vector<8x128xf32>
    %71 = math.tanh %65 : vector<8x128xf32>
    %72 = arith.select %13, %71, %70 : vector<8x128xi1>, vector<8x128xf32>
    %73 = vector.extract_strided_slice %72 {offsets = [0, 0], sizes = [8, 32], strides = [1, 1]} : vector<8x128xf32> to vector<8x32xf32>
    %74 = vector.extract_strided_slice %72 {offsets = [0, 32], sizes = [8, 32], strides = [1, 1]} : vector<8x128xf32> to vector<8x32xf32>
    %75 = vector.extract_strided_slice %72 {offsets = [0, 64], sizes = [8, 32], strides = [1, 1]} : vector<8x128xf32> to vector<8x32xf32>
    %76 = vector.extract_strided_slice %72 {offsets = [0, 96], sizes = [8, 32], strides = [1, 1]} : vector<8x128xf32> to vector<8x32xf32>
    %77 = arith.mulf %74, %57 : vector<8x32xf32>
    %78 = arith.mulf %73, %75 : vector<8x32xf32>
    %79 = arith.addf %77, %78 : vector<8x32xf32>
    %80 = math.tanh %79 : vector<8x32xf32>
    %81 = arith.mulf %76, %80 : vector<8x32xf32>
    %c3_i32 = arith.constant 3 : i32
    %c8_i32_22 = arith.constant 8 : i32
    %82 = arith.muli %c3_i32, %c8_i32_22 : i32
    %83 = tpu.assume_multiple %82, 8 : i32
    %84 = arith.index_cast %83 : i32 to index
    %c0_23 = arith.constant 0 : index
    %85 = vector.load %arg7[%84, %c0_23] : memref<64x128xf32, #tpu.memory_space<vmem>>, vector<8x128xf32>
    %cst_24 = arith.constant dense<0.000000e+00> : vector<8x128xf32>
    %86 = tpu.matmul %81, %14, %cst_24 {dimension_numbers = #tpu.dot_dimension_numbers<[1], [0], [0], [1], [0, 0, 1, 1], [], []>} : vector<8x32xf32>, vector<32x128xf32>, vector<8x128xf32> -> vector<8x128xf32>
    %87 = arith.addf %85, %86 : vector<8x128xf32>
    %88 = arith.negf %87 : vector<8x128xf32>
    %89 = math.exp %88 : vector<8x128xf32>
    %cst_25 = arith.constant 1.000000e+00 : f32
    %90 = vector.broadcast %cst_25 : f32 to vector<8x128xf32>
    %91 = arith.addf %90, %89 : vector<8x128xf32>
    %92 = arith.divf %90, %91 : vector<8x128xf32>
    %93 = math.tanh %87 : vector<8x128xf32>
    %94 = arith.select %13, %93, %92 : vector<8x128xi1>, vector<8x128xf32>
    %95 = vector.extract_strided_slice %94 {offsets = [0, 0], sizes = [8, 32], strides = [1, 1]} : vector<8x128xf32> to vector<8x32xf32>
    %96 = vector.extract_strided_slice %94 {offsets = [0, 32], sizes = [8, 32], strides = [1, 1]} : vector<8x128xf32> to vector<8x32xf32>
    %97 = vector.extract_strided_slice %94 {offsets = [0, 64], sizes = [8, 32], strides = [1, 1]} : vector<8x128xf32> to vector<8x32xf32>
    %98 = vector.extract_strided_slice %94 {offsets = [0, 96], sizes = [8, 32], strides = [1, 1]} : vector<8x128xf32> to vector<8x32xf32>
    %99 = arith.mulf %96, %79 : vector<8x32xf32>
    %100 = arith.mulf %95, %97 : vector<8x32xf32>
    %101 = arith.addf %99, %100 : vector<8x32xf32>
    %102 = math.tanh %101 : vector<8x32xf32>
    %103 = arith.mulf %98, %102 : vector<8x32xf32>
    %c4_i32 = arith.constant 4 : i32
    %c8_i32_26 = arith.constant 8 : i32
    %104 = arith.muli %c4_i32, %c8_i32_26 : i32
    %105 = tpu.assume_multiple %104, 8 : i32
    %106 = arith.index_cast %105 : i32 to index
    %c0_27 = arith.constant 0 : index
    %107 = vector.load %arg7[%106, %c0_27] : memref<64x128xf32, #tpu.memory_space<vmem>>, vector<8x128xf32>
    %cst_28 = arith.constant dense<0.000000e+00> : vector<8x128xf32>
    %108 = tpu.matmul %103, %14, %cst_28 {dimension_numbers = #tpu.dot_dimension_numbers<[1], [0], [0], [1], [0, 0, 1, 1], [], []>} : vector<8x32xf32>, vector<32x128xf32>, vector<8x128xf32> -> vector<8x128xf32>
    %109 = arith.addf %107, %108 : vector<8x128xf32>
    %110 = arith.negf %109 : vector<8x128xf32>
    %111 = math.exp %110 : vector<8x128xf32>
    %cst_29 = arith.constant 1.000000e+00 : f32
    %112 = vector.broadcast %cst_29 : f32 to vector<8x128xf32>
    %113 = arith.addf %112, %111 : vector<8x128xf32>
    %114 = arith.divf %112, %113 : vector<8x128xf32>
    %115 = math.tanh %109 : vector<8x128xf32>
    %116 = arith.select %13, %115, %114 : vector<8x128xi1>, vector<8x128xf32>
    %117 = vector.extract_strided_slice %116 {offsets = [0, 0], sizes = [8, 32], strides = [1, 1]} : vector<8x128xf32> to vector<8x32xf32>
    %118 = vector.extract_strided_slice %116 {offsets = [0, 32], sizes = [8, 32], strides = [1, 1]} : vector<8x128xf32> to vector<8x32xf32>
    %119 = vector.extract_strided_slice %116 {offsets = [0, 64], sizes = [8, 32], strides = [1, 1]} : vector<8x128xf32> to vector<8x32xf32>
    %120 = vector.extract_strided_slice %116 {offsets = [0, 96], sizes = [8, 32], strides = [1, 1]} : vector<8x128xf32> to vector<8x32xf32>
    %121 = arith.mulf %118, %101 : vector<8x32xf32>
    %122 = arith.mulf %117, %119 : vector<8x32xf32>
    %123 = arith.addf %121, %122 : vector<8x32xf32>
    %124 = math.tanh %123 : vector<8x32xf32>
    %125 = arith.mulf %120, %124 : vector<8x32xf32>
    %c5_i32 = arith.constant 5 : i32
    %c8_i32_30 = arith.constant 8 : i32
    %126 = arith.muli %c5_i32, %c8_i32_30 : i32
    %127 = tpu.assume_multiple %126, 8 : i32
    %128 = arith.index_cast %127 : i32 to index
    %c0_31 = arith.constant 0 : index
    %129 = vector.load %arg7[%128, %c0_31] : memref<64x128xf32, #tpu.memory_space<vmem>>, vector<8x128xf32>
    %cst_32 = arith.constant dense<0.000000e+00> : vector<8x128xf32>
    %130 = tpu.matmul %125, %14, %cst_32 {dimension_numbers = #tpu.dot_dimension_numbers<[1], [0], [0], [1], [0, 0, 1, 1], [], []>} : vector<8x32xf32>, vector<32x128xf32>, vector<8x128xf32> -> vector<8x128xf32>
    %131 = arith.addf %129, %130 : vector<8x128xf32>
    %132 = arith.negf %131 : vector<8x128xf32>
    %133 = math.exp %132 : vector<8x128xf32>
    %cst_33 = arith.constant 1.000000e+00 : f32
    %134 = vector.broadcast %cst_33 : f32 to vector<8x128xf32>
    %135 = arith.addf %134, %133 : vector<8x128xf32>
    %136 = arith.divf %134, %135 : vector<8x128xf32>
    %137 = math.tanh %131 : vector<8x128xf32>
    %138 = arith.select %13, %137, %136 : vector<8x128xi1>, vector<8x128xf32>
    %139 = vector.extract_strided_slice %138 {offsets = [0, 0], sizes = [8, 32], strides = [1, 1]} : vector<8x128xf32> to vector<8x32xf32>
    %140 = vector.extract_strided_slice %138 {offsets = [0, 32], sizes = [8, 32], strides = [1, 1]} : vector<8x128xf32> to vector<8x32xf32>
    %141 = vector.extract_strided_slice %138 {offsets = [0, 64], sizes = [8, 32], strides = [1, 1]} : vector<8x128xf32> to vector<8x32xf32>
    %142 = vector.extract_strided_slice %138 {offsets = [0, 96], sizes = [8, 32], strides = [1, 1]} : vector<8x128xf32> to vector<8x32xf32>
    %143 = arith.mulf %140, %123 : vector<8x32xf32>
    %144 = arith.mulf %139, %141 : vector<8x32xf32>
    %145 = arith.addf %143, %144 : vector<8x32xf32>
    %146 = math.tanh %145 : vector<8x32xf32>
    %147 = arith.mulf %142, %146 : vector<8x32xf32>
    %c6_i32 = arith.constant 6 : i32
    %c8_i32_34 = arith.constant 8 : i32
    %148 = arith.muli %c6_i32, %c8_i32_34 : i32
    %149 = tpu.assume_multiple %148, 8 : i32
    %150 = arith.index_cast %149 : i32 to index
    %c0_35 = arith.constant 0 : index
    %151 = vector.load %arg7[%150, %c0_35] : memref<64x128xf32, #tpu.memory_space<vmem>>, vector<8x128xf32>
    %cst_36 = arith.constant dense<0.000000e+00> : vector<8x128xf32>
    %152 = tpu.matmul %147, %14, %cst_36 {dimension_numbers = #tpu.dot_dimension_numbers<[1], [0], [0], [1], [0, 0, 1, 1], [], []>} : vector<8x32xf32>, vector<32x128xf32>, vector<8x128xf32> -> vector<8x128xf32>
    %153 = arith.addf %151, %152 : vector<8x128xf32>
    %154 = arith.negf %153 : vector<8x128xf32>
    %155 = math.exp %154 : vector<8x128xf32>
    %cst_37 = arith.constant 1.000000e+00 : f32
    %156 = vector.broadcast %cst_37 : f32 to vector<8x128xf32>
    %157 = arith.addf %156, %155 : vector<8x128xf32>
    %158 = arith.divf %156, %157 : vector<8x128xf32>
    %159 = math.tanh %153 : vector<8x128xf32>
    %160 = arith.select %13, %159, %158 : vector<8x128xi1>, vector<8x128xf32>
    %161 = vector.extract_strided_slice %160 {offsets = [0, 0], sizes = [8, 32], strides = [1, 1]} : vector<8x128xf32> to vector<8x32xf32>
    %162 = vector.extract_strided_slice %160 {offsets = [0, 32], sizes = [8, 32], strides = [1, 1]} : vector<8x128xf32> to vector<8x32xf32>
    %163 = vector.extract_strided_slice %160 {offsets = [0, 64], sizes = [8, 32], strides = [1, 1]} : vector<8x128xf32> to vector<8x32xf32>
    %164 = vector.extract_strided_slice %160 {offsets = [0, 96], sizes = [8, 32], strides = [1, 1]} : vector<8x128xf32> to vector<8x32xf32>
    %165 = arith.mulf %162, %145 : vector<8x32xf32>
    %166 = arith.mulf %161, %163 : vector<8x32xf32>
    %167 = arith.addf %165, %166 : vector<8x32xf32>
    %168 = math.tanh %167 : vector<8x32xf32>
    %169 = arith.mulf %164, %168 : vector<8x32xf32>
    %c7_i32 = arith.constant 7 : i32
    %c8_i32_38 = arith.constant 8 : i32
    %170 = arith.muli %c7_i32, %c8_i32_38 : i32
    %171 = tpu.assume_multiple %170, 8 : i32
    %172 = arith.index_cast %171 : i32 to index
    %c0_39 = arith.constant 0 : index
    %173 = vector.load %arg7[%172, %c0_39] : memref<64x128xf32, #tpu.memory_space<vmem>>, vector<8x128xf32>
    %cst_40 = arith.constant dense<0.000000e+00> : vector<8x128xf32>
    %174 = tpu.matmul %169, %14, %cst_40 {dimension_numbers = #tpu.dot_dimension_numbers<[1], [0], [0], [1], [0, 0, 1, 1], [], []>} : vector<8x32xf32>, vector<32x128xf32>, vector<8x128xf32> -> vector<8x128xf32>
    %175 = arith.addf %173, %174 : vector<8x128xf32>
    %176 = arith.negf %175 : vector<8x128xf32>
    %177 = math.exp %176 : vector<8x128xf32>
    %cst_41 = arith.constant 1.000000e+00 : f32
    %178 = vector.broadcast %cst_41 : f32 to vector<8x128xf32>
    %179 = arith.addf %178, %177 : vector<8x128xf32>
    %180 = arith.divf %178, %179 : vector<8x128xf32>
    %181 = math.tanh %175 : vector<8x128xf32>
    %182 = arith.select %13, %181, %180 : vector<8x128xi1>, vector<8x128xf32>
    %183 = vector.extract_strided_slice %182 {offsets = [0, 0], sizes = [8, 32], strides = [1, 1]} : vector<8x128xf32> to vector<8x32xf32>
    %184 = vector.extract_strided_slice %182 {offsets = [0, 32], sizes = [8, 32], strides = [1, 1]} : vector<8x128xf32> to vector<8x32xf32>
    %185 = vector.extract_strided_slice %182 {offsets = [0, 64], sizes = [8, 32], strides = [1, 1]} : vector<8x128xf32> to vector<8x32xf32>
    %186 = vector.extract_strided_slice %182 {offsets = [0, 96], sizes = [8, 32], strides = [1, 1]} : vector<8x128xf32> to vector<8x32xf32>
    %187 = arith.mulf %184, %167 : vector<8x32xf32>
    %188 = arith.mulf %183, %185 : vector<8x32xf32>
    %189 = arith.addf %187, %188 : vector<8x32xf32>
    %190 = math.tanh %189 : vector<8x32xf32>
    %191 = arith.mulf %186, %190 : vector<8x32xf32>
    %c8_i32_42 = arith.constant 8 : i32
    %c0_43 = arith.constant 0 : index
    %c0_44 = arith.constant 0 : index
    %192 = vector.load %arg5[%c0_43, %c0_44] : memref<1x32xf32, #tpu.memory_space<vmem>>, vector<1x32xf32>
    %193 = vector.broadcast %192 : vector<1x32xf32> to vector<8x32xf32>
    %194 = arith.mulf %191, %193 : vector<8x32xf32>
    %cst_45 = arith.constant dense<0.000000e+00> : vector<8xf32>
    %195 = vector.multi_reduction <add>, %194, %cst_45 [1] : vector<8x32xf32> to vector<8xf32>
    %196 = vector.shape_cast %195 : vector<8xf32> to vector<8x1xf32>
    %197 = vector.shape_cast %196 : vector<8x1xf32> to vector<8x1xf32>
    %198 = vector.broadcast %197 : vector<8x1xf32> to vector<8x128xf32>
    %c0_46 = arith.constant 0 : index
    %c0_47 = arith.constant 0 : index
    %199 = vector.load %arg6[%c0_46, %c0_47] : memref<8x128xf32, #tpu.memory_space<vmem>>, vector<8x128xf32>
    tpu.vector_store %arg6[%c0_46, %c0_47], %198 {strides = array<i32>} : memref<8x128xf32, #tpu.memory_space<vmem>>, vector<8x128xf32>,
    return
  }
  func.func @transform_0(%arg0: i32) -> (i32, i32, i32) {
    %c0_i32 = arith.constant 0 : i32
    %c0_i32_0 = arith.constant 0 : i32
    %c0_i32_1 = arith.constant 0 : i32
    return %arg0, %c0_i32, %c0_i32_0 : i32, i32, i32
  }
  func.func @transform_1(%arg0: i32) -> (i32, i32) {
    %c0_i32 = arith.constant 0 : i32
    %c0_i32_0 = arith.constant 0 : i32
    %c0_i32_1 = arith.constant 0 : i32
    return %c0_i32, %c0_i32_0 : i32, i32
  }
  func.func @transform_2(%arg0: i32) -> (i32, i32) {
    %c0_i32 = arith.constant 0 : i32
    %c0_i32_0 = arith.constant 0 : i32
    %c0_i32_1 = arith.constant 0 : i32
    return %c0_i32, %c0_i32_0 : i32, i32
  }
  func.func @transform_3(%arg0: i32) -> (i32, i32) {
    %c0_i32 = arith.constant 0 : i32
    %c0_i32_0 = arith.constant 0 : i32
    %c0_i32_1 = arith.constant 0 : i32
    return %c0_i32, %c0_i32_0 : i32, i32
  }
  func.func @transform_4(%arg0: i32) -> (i32, i32) {
    %c0_i32 = arith.constant 0 : i32
    %c0_i32_0 = arith.constant 0 : i32
    %c0_i32_1 = arith.constant 0 : i32
    return %c0_i32, %c0_i32_0 : i32, i32
  }
  func.func @transform_5(%arg0: i32) -> (i32, i32) {
    %c0_i32 = arith.constant 0 : i32
    %c0_i32_0 = arith.constant 0 : i32
    return %arg0, %c0_i32 : i32, i32
  }
}

</mosaic_0001>

<llo_original>
// kernel: shallow_regression_lstm_forward.1
$region0: #{shallow_regression_lstm_forward.1}
  #allocation0 [shape = 'u32[]', space=smem, size = 0x4, offset = 0x4, fixed_abs, tag = 'smem constant byte address 0x4 - core index']
  #allocation1 [shape = 'u32[144,128]{1,0:T(1,128)}', space=vmem, size = 0x12000, scoped, tag = 'internal scratch']
  #allocation2 [shape = 'f32[64,128]{1,0:T(8,128)}', space=vmem, size = 0x8000, scoped, tag = 'scratch operand']
  %s0 = inlined_call_operand.vmem [shape: f32[1,64,4], index: 0, kind: input, shape index: {}]
  %s1 = inlined_call_operand.vmem [shape: f32[4,128], index: 1, kind: input, shape index: {}]
  %s2 = inlined_call_operand.vmem [shape: f32[32,128], index: 2, kind: input, shape index: {}]
  %s3 = inlined_call_operand.vmem [shape: f32[1,128], index: 3, kind: input, shape index: {}]
  %s4 = inlined_call_operand.vmem [shape: f32[1,32], index: 4, kind: input, shape index: {}]
  %s5 = inlined_call_operand.vmem [shape: f32[8,128], index: 5, kind: output, shape index: {}]
  %s6 = sld [smem:[#allocation0]]
  $region30: #{shallow_regression_lstm_forward.1} parent=0
    _
  %s8 = ssub.s32 1, %s6
  %s9 = scalar_select 0, %s8, %s6
  // Predicated region
  $region2: #{shallow_regression_lstm_forward.1} parent=0 // pred_check
    _
  $region3: #{shallow_regression_lstm_forward.1} parent=0 // pred_check_branch
    %11 = sbr.rel (0) target = $region5
  $region4: #{shallow_regression_lstm_forward.1} parent=0 // pred_region
    _
  $region5: #{shallow_regression_lstm_forward.1} parent=0 // pred_fallthru
    _
  // Predicated region
  $region6: #{shallow_regression_lstm_forward.1} parent=0 // pred_check
    _
  $region7: #{shallow_regression_lstm_forward.1} parent=0 // pred_check_branch
    %13 = sbr.rel (0) target = $region9
  $region8: #{shallow_regression_lstm_forward.1} parent=0 // pred_region
    _
  $region9: #{shallow_regression_lstm_forward.1} parent=0 // pred_fallthru
    _
  // Predicated region
  $region10: #{shallow_regression_lstm_forward.1} parent=0 // pred_check
    _
  $region11: #{shallow_regression_lstm_forward.1} parent=0 // pred_check_branch
    %15 = sbr.rel (0) target = $region13
  $region12: #{shallow_regression_lstm_forward.1} parent=0 // pred_region
    _
  $region13: #{shallow_regression_lstm_forward.1} parent=0 // pred_fallthru
    _
  // Predicated region
  $region14: #{shallow_regression_lstm_forward.1} parent=0 // pred_check
    _
  $region15: #{shallow_regression_lstm_forward.1} parent=0 // pred_check_branch
    %17 = sbr.rel (0) target = $region17
  $region16: #{shallow_regression_lstm_forward.1} parent=0 // pred_region
    _
  $region17: #{shallow_regression_lstm_forward.1} parent=0 // pred_fallthru
    _
  // Predicated region
  $region18: #{shallow_regression_lstm_forward.1} parent=0 // pred_check
    _
  $region19: #{shallow_regression_lstm_forward.1} parent=0 // pred_check_branch
    %19 = sbr.rel (0) target = $region21
  $region20: #{shallow_regression_lstm_forward.1} parent=0 // pred_region
    _
  $region21: #{shallow_regression_lstm_forward.1} parent=0 // pred_fallthru
    _
  %v20 = vld [vmem:[%s0] sm:$0xff]
  %v21 = vld [vmem:[%s0 + $0x8] sm:$0xff]
  %v22 = vld [vmem:[%s0 + $0x10] sm:$0xff]
  %v23 = vld [vmem:[%s0 + $0x18] sm:$0xff]
  %v24 = vld [vmem:[%s0 + $0x20] sm:$0xff]
  %v25 = vld [vmem:[%s0 + $0x28] sm:$0xff]
  %v26 = vld [vmem:[%s0 + $0x30] sm:$0xff]
  %v27 = vld [vmem:[%s0 + $0x38] sm:$0xff]
  %v28 = vld [vmem:[%s1] sm:$0xf]
  %v29 = vld [vmem:[%s3] sm:$0x1]
  %v31 = vlaneseq
  %v32 = vshrl.u32 %v31, 7
  %v33 = vsub.s32 0, %v32
  %v34 = vrot.slane %v29, %v33
  %vm36 = vcmask 31744
  %v38 = vsel %vm36, %v20, 0
  %v41 = vsel %vm36, %v21, 0
  %v44 = vsel %vm36, %v22, 0
  %v47 = vsel %vm36, %v23, 0
  %v50 = vsel %vm36, %v24, 0
  %v53 = vsel %vm36, %v25, 0
  %v56 = vsel %vm36, %v26, 0
  %v59 = vsel %vm36, %v27, 0
  %vm61 = vcmask 1043456
  %v63 = vsel %vm61, %v28, 0
  %65 = vmatprep.subr.mxu0 0.0
  %66 = vmatpush1.msra.mxu0 %v63
  %67 = vmatprep.subr.mxu0 0.0
  %68 = vmatpush1.msra.mxu0 0.0
  %69 = vmatprep.subr.mxu0 0.0
  %70 = vmatpush1.msra.mxu0 0.0
  %71 = vmatprep.subr.mxu0 0.0
  %72 = vmatpush1.msra.mxu0 0.0
  %73 = vmatprep.subr.mxu0 0.0
  %74 = vmatpush1.msra.mxu0 0.0
  %75 = vmatprep.subr.mxu0 0.0
  %76 = vmatpush1.msra.mxu0 0.0
  %77 = vmatprep.subr.mxu0 0.0
  %78 = vmatpush1.msra.mxu0 0.0
  %79 = vmatprep.subr.mxu0 0.0
  %80 = vmatpush1.msra.mxu0 0.0
  %81 = vmatprep.subr.mxu0 0.0
  %82 = vmatpush1.msra.mxu0 0.0
  %83 = vmatprep.subr.mxu0 0.0
  %84 = vmatpush1.msra.mxu0 0.0
  %85 = vmatprep.subr.mxu0 0.0
  %86 = vmatpush1.msra.mxu0 0.0
  %87 = vmatprep.subr.mxu0 0.0
  %88 = vmatpush1.msra.mxu0 0.0
  %89 = vmatprep.subr.mxu0 0.0
  %90 = vmatpush1.msra.mxu0 0.0
  %91 = vmatprep.subr.mxu0 0.0
  %92 = vmatpush1.msra.mxu0 0.0
  %93 = vmatprep.subr.mxu0 0.0
  %94 = vmatpush1.msra.mxu0 0.0
  %95 = vmatprep.subr.mxu0 0.0
  %96 = vmatpush1.msra.mxu0 0.0
  %97 = vmatprep.subr.mxu0 0.0
  %98 = vmatpush1.msra.mxu0 0.0
  %99 = vmatprep.subr.mxu0 0.0
  %100 = vmatpush1.msra.mxu0 0.0
  %101 = vmatprep.subr.mxu0 0.0
  %102 = vmatpush1.msra.mxu0 0.0
  %103 = vmatprep.subr.mxu0 0.0
  %104 = vmatpush1.msra.mxu0 0.0
  %105 = vmatprep.subr.mxu0 0.0
  %106 = vmatpush1.msra.mxu0 0.0
  %107 = vmatprep.subr.mxu0 0.0
  %108 = vmatpush1.msra.mxu0 0.0
  %109 = vmatprep.subr.mxu0 0.0
  %110 = vmatpush1.msra.mxu0 0.0
  %111 = vmatprep.subr.mxu0 0.0
  %112 = vmatpush1.msra.mxu0 0.0
  %113 = vmatprep.subr.mxu0 0.0
  %114 = vmatpush1.msra.mxu0 0.0
  %115 = vmatprep.subr.mxu0 0.0
  %116 = vmatpush1.msra.mxu0 0.0
  %117 = vmatprep.subr.mxu0 0.0
  %118 = vmatpush1.msra.mxu0 0.0
  %119 = vmatprep.subr.mxu0 0.0
  %120 = vmatpush1.msra.mxu0 0.0
  %121 = vmatprep.subr.mxu0 0.0
  %122 = vmatpush1.msra.mxu0 0.0
  %123 = vmatprep.subr.mxu0 0.0
  %124 = vmatpush1.msra.mxu0 0.0
  %125 = vmatprep.subr.mxu0 0.0
  %126 = vmatpush1.msra.mxu0 0.0
  %127 = vmatprep.subr.mxu0 0.0
  %128 = vmatpush1.msra.mxu0 0.0
  %129 = vmatprep.mubr.f32.mxu0 0.0
  %130 = vmatmul.mubr.f32.gmra.mrb[0].mxu0 %v38
  %v131 = vpop.f32.mrb[0].mxu0
  %v132 = vadd.f32 %v34, %v131
  %v133 = vpop.f32.mrb[0].mxu0
  %134 = vmatprep.mubr.f32.mxu0 0.0
  %135 = vmatmul.mubr.f32.gmra.mrb[0].mxu0 %v41
  %v136 = vpop.f32.mrb[0].mxu0
  %v137 = vadd.f32 %v34, %v136
  %v138 = vpop.f32.mrb[0].mxu0
  %139 = vmatprep.mubr.f32.mxu0 0.0
  %140 = vmatmul.mubr.f32.gmra.mrb[0].mxu0 %v44
  %v141 = vpop.f32.mrb[0].mxu0
  %v142 = vadd.f32 %v34, %v141
  %v143 = vpop.f32.mrb[0].mxu0
  %144 = vmatprep.mubr.f32.mxu0 0.0
  %145 = vmatmul.mubr.f32.gmra.mrb[0].mxu0 %v47
  %v146 = vpop.f32.mrb[0].mxu0
  %v147 = vadd.f32 %v34, %v146
  %v148 = vpop.f32.mrb[0].mxu0
  %149 = vmatprep.mubr.f32.mxu0 0.0
  %150 = vmatmul.mubr.f32.gmra.mrb[0].mxu0 %v50
  %v151 = vpop.f32.mrb[0].mxu0
  %v152 = vadd.f32 %v34, %v151
  %v153 = vpop.f32.mrb[0].mxu0
  %154 = vmatprep.mubr.f32.mxu0 0.0
  %155 = vmatmul.mubr.f32.gmra.mrb[0].mxu0 %v53
  %v156 = vpop.f32.mrb[0].mxu0
  %v157 = vadd.f32 %v34, %v156
  %v158 = vpop.f32.mrb[0].mxu0
  %159 = vmatprep.mubr.f32.mxu0 0.0
  %160 = vmatmul.mubr.f32.gmra.mrb[0].mxu0 %v56
  %v161 = vpop.f32.mrb[0].mxu0
  %v162 = vadd.f32 %v34, %v161
  %v163 = vpop.f32.mrb[0].mxu0
  %164 = vmatprep.mubr.f32.mxu0 0.0
  %165 = vmatmul.mubr.f32.gmra.mrb[0].mxu0 %v59
  %v166 = vpop.f32.mrb[0].mxu0
  %v167 = vadd.f32 %v34, %v166
  %v168 = vpop.f32.mrb[0].mxu0
  %169 = vdwg.mxu0
  %170 = vst [vmem:[#allocation2] sm:$0xff] %v132
  %171 = vst [vmem:[#allocation2 + $0x8] sm:$0xff] %v137
  %172 = vst [vmem:[#allocation2 + $0x10] sm:$0xff] %v142
  %173 = vst [vmem:[#allocation2 + $0x18] sm:$0xff] %v147
  %174 = vst [vmem:[#allocation2 + $0x20] sm:$0xff] %v152
  %175 = vst [vmem:[#allocation2 + $0x28] sm:$0xff] %v157
  %176 = vst [vmem:[#allocation2 + $0x30] sm:$0xff] %v162
  %177 = vst [vmem:[#allocation2 + $0x38] sm:$0xff] %v167
  %v178 = vlaneseq
  %v179 = vand.u32 %v178, 127
  %vm180 = vcmp.ge.s32.totalorder %v179, 64
  %vm181 = vcmp.lt.s32.totalorder %v179, 96
  %vm182 = vmand %vm180, %vm181
  %v183 = vld [vmem:[%s2] sm:$0xff]
  %v184 = vld [vmem:[%s2 + $0x8] sm:$0xff]
  %v185 = vld [vmem:[%s2 + $0x10] sm:$0xff]
  %v186 = vld [vmem:[%s2 + $0x18] sm:$0xff]
  %v187 = vld [vmem:[#allocation2] sm:$0xff]
  %vm188 = vcmask 261120
  %v190 = vsel %vm188, 0.0, 0
  %192 = vmatprep.subr.mxu0 0.0
  %193 = vmatpush1.msra.mxu0 %v183
  %194 = vmatprep.subr.mxu0 0.0
  %195 = vmatpush1.msra.mxu0 %v184
  %196 = vmatprep.subr.mxu0 0.0
  %197 = vmatpush1.msra.mxu0 %v185
  %198 = vmatprep.subr.mxu0 0.0
  %199 = vmatpush1.msra.mxu0 %v186
  %200 = vmatprep.subr.mxu0 0.0
  %201 = vmatpush1.msra.mxu0 0.0
  %202 = vmatprep.subr.mxu0 0.0
  %203 = vmatpush1.msra.mxu0 0.0
  %204 = vmatprep.subr.mxu0 0.0
  %205 = vmatpush1.msra.mxu0 0.0
  %206 = vmatprep.subr.mxu0 0.0
  %207 = vmatpush1.msra.mxu0 0.0
  %208 = vmatprep.subr.mxu0 0.0
  %209 = vmatpush1.msra.mxu0 0.0
  %210 = vmatprep.subr.mxu0 0.0
  %211 = vmatpush1.msra.mxu0 0.0
  %212 = vmatprep.subr.mxu0 0.0
  %213 = vmatpush1.msra.mxu0 0.0
  %214 = vmatprep.subr.mxu0 0.0
  %215 = vmatpush1.msra.mxu0 0.0
  %216 = vmatprep.subr.mxu0 0.0
  %217 = vmatpush1.msra.mxu0 0.0
  %218 = vmatprep.subr.mxu0 0.0
  %219 = vmatpush1.msra.mxu0 0.0
  %220 = vmatprep.subr.mxu0 0.0
  %221 = vmatpush1.msra.mxu0 0.0
  %222 = vmatprep.subr.mxu0 0.0
  %223 = vmatpush1.msra.mxu0 0.0
  %224 = vmatprep.subr.mxu0 0.0
  %225 = vmatpush1.msra.mxu0 0.0
  %226 = vmatprep.subr.mxu0 0.0
  %227 = vmatpush1.msra.mxu0 0.0
  %228 = vmatprep.subr.mxu0 0.0
  %229 = vmatpush1.msra.mxu0 0.0
  %230 = vmatprep.subr.mxu0 0.0
  %231 = vmatpush1.msra.mxu0 0.0
  %232 = vmatprep.subr.mxu0 0.0
  %233 = vmatpush1.msra.mxu0 0.0
  %234 = vmatprep.subr.mxu0 0.0
  %235 = vmatpush1.msra.mxu0 0.0
  %236 = vmatprep.subr.mxu0 0.0
  %237 = vmatpush1.msra.mxu0 0.0
  %238 = vmatprep.subr.mxu0 0.0
  %239 = vmatpush1.msra.mxu0 0.0
  %240 = vmatprep.subr.mxu0 0.0
  %241 = vmatpush1.msra.mxu0 0.0
  %242 = vmatprep.subr.mxu0 0.0
  %243 = vmatpush1.msra.mxu0 0.0
  %244 = vmatprep.subr.mxu0 0.0
  %245 = vmatpush1.msra.mxu0 0.0
  %246 = vmatprep.subr.mxu0 0.0
  %247 = vmatpush1.msra.mxu0 0.0
  %248 = vmatprep.subr.mxu0 0.0
  %249 = vmatpush1.msra.mxu0 0.0
  %250 = vmatprep.subr.mxu0 0.0
  %251 = vmatpush1.msra.mxu0 0.0
  %252 = vmatprep.subr.mxu0 0.0
  %253 = vmatpush1.msra.mxu0 0.0
  %254 = vmatprep.subr.mxu0 0.0
  %255 = vmatpush1.msra.mxu0 0.0
  %256 = vmatprep.mubr.f32.mxu0 0.0
  %257 = vmatmul.mubr.f32.gmra.mrb[0].mxu0 %v190
  %v258 = vpop.f32.mrb[0].mxu0
  %v259 = vadd.f32 0.0, %v258
  %v260 = vpop.f32.mrb[0].mxu0
  %261 = vdwg.mxu0
  %v262 = vadd.f32 %v187, %v259
  %v263 = vxor.u32 %v262, 2147483648
  %v264 = vmul.f32 %v263, 1.442695
  %v265 = vpow.pop %v264
  %v266 = vadd.f32 %v265, 1.0
  %v267 = vrcp.pop %v266
  %v268 = vmul.f32 1.0, %v267
  %v269 = vtanh.pop %v262
  %v270 = vsel %vm182, %v269, %v268
  %v271 = vmul.f32 %v270, 0.0
  %273 = vrot.lane.b32.xlu0 %v270, 64
  %v274 = vpop.permute.xlu0 %273
  %v276 = vmul.f32 %v270, %v274
  %278 = vrot.lane.b32.xlu0 %v276, 32
  %v279 = vpop.permute.xlu0 %278
  %v281 = vadd.f32 %v271, %v279
  %v282 = vtanh.pop %v281
  %284 = vrot.lane.b32.xlu0 %v282, 64
  %v285 = vpop.permute.xlu0 %284
  %v287 = vmul.f32 %v270, %v285
  %s288 = scalar_lea.vmem [#allocation2], 8
  %v289 = vld [vmem:[%s288] sm:$0xff]
  %291 = vrot.lane.b32.xlu0 %v287, 32
  %v292 = vpop.permute.xlu0 %291
  %v293 = vsel %vm188, %v292, 0
  %295 = vmatprep.subr.mxu0 0.0
  %296 = vmatpush1.msra.mxu0 %v183
  %297 = vmatprep.subr.mxu0 0.0
  %298 = vmatpush1.msra.mxu0 %v184
  %299 = vmatprep.subr.mxu0 0.0
  %300 = vmatpush1.msra.mxu0 %v185
  %301 = vmatprep.subr.mxu0 0.0
  %302 = vmatpush1.msra.mxu0 %v186
  %303 = vmatprep.subr.mxu0 0.0
  %304 = vmatpush1.msra.mxu0 0.0
  %305 = vmatprep.subr.mxu0 0.0
  %306 = vmatpush1.msra.mxu0 0.0
  %307 = vmatprep.subr.mxu0 0.0
  %308 = vmatpush1.msra.mxu0 0.0
  %309 = vmatprep.subr.mxu0 0.0
  %310 = vmatpush1.msra.mxu0 0.0
  %311 = vmatprep.subr.mxu0 0.0
  %312 = vmatpush1.msra.mxu0 0.0
  %313 = vmatprep.subr.mxu0 0.0
  %314 = vmatpush1.msra.mxu0 0.0
  %315 = vmatprep.subr.mxu0 0.0
  %316 = vmatpush1.msra.mxu0 0.0
  %317 = vmatprep.subr.mxu0 0.0
  %318 = vmatpush1.msra.mxu0 0.0
  %319 = vmatprep.subr.mxu0 0.0
  %320 = vmatpush1.msra.mxu0 0.0
  %321 = vmatprep.subr.mxu0 0.0
  %322 = vmatpush1.msra.mxu0 0.0
  %323 = vmatprep.subr.mxu0 0.0
  %324 = vmatpush1.msra.mxu0 0.0
  %325 = vmatprep.subr.mxu0 0.0
  %326 = vmatpush1.msra.mxu0 0.0
  %327 = vmatprep.subr.mxu0 0.0
  %328 = vmatpush1.msra.mxu0 0.0
  %329 = vmatprep.subr.mxu0 0.0
  %330 = vmatpush1.msra.mxu0 0.0
  %331 = vmatprep.subr.mxu0 0.0
  %332 = vmatpush1.msra.mxu0 0.0
  %333 = vmatprep.subr.mxu0 0.0
  %334 = vmatpush1.msra.mxu0 0.0
  %335 = vmatprep.subr.mxu0 0.0
  %336 = vmatpush1.msra.mxu0 0.0
  %337 = vmatprep.subr.mxu0 0.0
  %338 = vmatpush1.msra.mxu0 0.0
  %339 = vmatprep.subr.mxu0 0.0
  %340 = vmatpush1.msra.mxu0 0.0
  %341 = vmatprep.subr.mxu0 0.0
  %342 = vmatpush1.msra.mxu0 0.0
  %343 = vmatprep.subr.mxu0 0.0
  %344 = vmatpush1.msra.mxu0 0.0
  %345 = vmatprep.subr.mxu0 0.0
  %346 = vmatpush1.msra.mxu0 0.0
  %347 = vmatprep.subr.mxu0 0.0
  %348 = vmatpush1.msra.mxu0 0.0
  %349 = vmatprep.subr.mxu0 0.0
  %350 = vmatpush1.msra.mxu0 0.0
  %351 = vmatprep.subr.mxu0 0.0
  %352 = vmatpush1.msra.mxu0 0.0
  %353 = vmatprep.subr.mxu0 0.0
  %354 = vmatpush1.msra.mxu0 0.0
  %355 = vmatprep.subr.mxu0 0.0
  %356 = vmatpush1.msra.mxu0 0.0
  %357 = vmatprep.subr.mxu0 0.0
  %358 = vmatpush1.msra.mxu0 0.0
  %359 = vmatprep.mubr.f32.mxu0 0.0
  %360 = vmatmul.mubr.f32.gmra.mrb[0].mxu0 %v293
  %v361 = vpop.f32.mrb[0].mxu0
  %v362 = vadd.f32 0.0, %v361
  %v363 = vpop.f32.mrb[0].mxu0
  %364 = vdwg.mxu0
  %v365 = vadd.f32 %v289, %v362
  %v366 = vxor.u32 %v365, 2147483648
  %v367 = vmul.f32 %v366, 1.442695
  %v368 = vpow.pop %v367
  %v369 = vadd.f32 %v368, 1.0
  %v370 = vrcp.pop %v369
  %v371 = vmul.f32 1.0, %v370
  %v372 = vtanh.pop %v365
  %v373 = vsel %vm182, %v372, %v371
  %v374 = vmul.f32 %v373, %v281
  %376 = vrot.lane.b32.xlu0 %v373, 64
  %v377 = vpop.permute.xlu0 %376
  %v379 = vmul.f32 %v373, %v377
  %381 = vrot.lane.b32.xlu0 %v379, 32
  %v382 = vpop.permute.xlu0 %381
  %v384 = vadd.f32 %v374, %v382
  %v385 = vtanh.pop %v384
  %387 = vrot.lane.b32.xlu0 %v385, 64
  %v388 = vpop.permute.xlu0 %387
  %v390 = vmul.f32 %v373, %v388
  %s391 = scalar_lea.vmem [#allocation2], 16
  %v392 = vld [vmem:[%s391] sm:$0xff]
  %394 = vrot.lane.b32.xlu0 %v390, 32
  %v395 = vpop.permute.xlu0 %394
  %v396 = vsel %vm188, %v395, 0
  %398 = vmatprep.subr.mxu0 0.0
  %399 = vmatpush1.msra.mxu0 %v183
  %400 = vmatprep.subr.mxu0 0.0
  %401 = vmatpush1.msra.mxu0 %v184
  %402 = vmatprep.subr.mxu0 0.0
  %403 = vmatpush1.msra.mxu0 %v185
  %404 = vmatprep.subr.mxu0 0.0
  %405 = vmatpush1.msra.mxu0 %v186
  %406 = vmatprep.subr.mxu0 0.0
  %407 = vmatpush1.msra.mxu0 0.0
  %408 = vmatprep.subr.mxu0 0.0
  %409 = vmatpush1.msra.mxu0 0.0
  %410 = vmatprep.subr.mxu0 0.0
  %411 = vmatpush1.msra.mxu0 0.0
  %412 = vmatprep.subr.mxu0 0.0
  %413 = vmatpush1.msra.mxu0 0.0
  %414 = vmatprep.subr.mxu0 0.0
  %415 = vmatpush1.msra.mxu0 0.0
  %416 = vmatprep.subr.mxu0 0.0
  %417 = vmatpush1.msra.mxu0 0.0
  %418 = vmatprep.subr.mxu0 0.0
  %419 = vmatpush1.msra.mxu0 0.0
  %420 = vmatprep.subr.mxu0 0.0
  %421 = vmatpush1.msra.mxu0 0.0
  %422 = vmatprep.subr.mxu0 0.0
  %423 = vmatpush1.msra.mxu0 0.0
  %424 = vmatprep.subr.mxu0 0.0
  %425 = vmatpush1.msra.mxu0 0.0
  %426 = vmatprep.subr.mxu0 0.0
  %427 = vmatpush1.msra.mxu0 0.0
  %428 = vmatprep.subr.mxu0 0.0
  %429 = vmatpush1.msra.mxu0 0.0
  %430 = vmatprep.subr.mxu0 0.0
  %431 = vmatpush1.msra.mxu0 0.0
  %432 = vmatprep.subr.mxu0 0.0
  %433 = vmatpush1.msra.mxu0 0.0
  %434 = vmatprep.subr.mxu0 0.0
  %435 = vmatpush1.msra.mxu0 0.0
  %436 = vmatprep.subr.mxu0 0.0
  %437 = vmatpush1.msra.mxu0 0.0
  %438 = vmatprep.subr.mxu0 0.0
  %439 = vmatpush1.msra.mxu0 0.0
  %440 = vmatprep.subr.mxu0 0.0
  %441 = vmatpush1.msra.mxu0 0.0
  %442 = vmatprep.subr.mxu0 0.0
  %443 = vmatpush1.msra.mxu0 0.0
  %444 = vmatprep.subr.mxu0 0.0
  %445 = vmatpush1.msra.mxu0 0.0
  %446 = vmatprep.subr.mxu0 0.0
  %447 = vmatpush1.msra.mxu0 0.0
  %448 = vmatprep.subr.mxu0 0.0
  %449 = vmatpush1.msra.mxu0 0.0
  %450 = vmatprep.subr.mxu0 0.0
  %451 = vmatpush1.msra.mxu0 0.0
  %452 = vmatprep.subr.mxu0 0.0
  %453 = vmatpush1.msra.mxu0 0.0
  %454 = vmatprep.subr.mxu0 0.0
  %455 = vmatpush1.msra.mxu0 0.0
  %456 = vmatprep.subr.mxu0 0.0
  %457 = vmatpush1.msra.mxu0 0.0
  %458 = vmatprep.subr.mxu0 0.0
  %459 = vmatpush1.msra.mxu0 0.0
  %460 = vmatprep.subr.mxu0 0.0
  %461 = vmatpush1.msra.mxu0 0.0
  %462 = vmatprep.mubr.f32.mxu0 0.0
  %463 = vmatmul.mubr.f32.gmra.mrb[0].mxu0 %v396
  %v464 = vpop.f32.mrb[0].mxu0
  %v465 = vadd.f32 0.0, %v464
  %v466 = vpop.f32.mrb[0].mxu0
  %467 = vdwg.mxu0
  %v468 = vadd.f32 %v392, %v465
  %v469 = vxor.u32 %v468, 2147483648
  %v470 = vmul.f32 %v469, 1.442695
  %v471 = vpow.pop %v470
  %v472 = vadd.f32 %v471, 1.0
  %v473 = vrcp.pop %v472
  %v474 = vmul.f32 1.0, %v473
  %v475 = vtanh.pop %v468
  %v476 = vsel %vm182, %v475, %v474
  %v477 = vmul.f32 %v476, %v384
  %479 = vrot.lane.b32.xlu0 %v476, 64
  %v480 = vpop.permute.xlu0 %479
  %v482 = vmul.f32 %v476, %v480
  %484 = vrot.lane.b32.xlu0 %v482, 32
  %v485 = vpop.permute.xlu0 %484
  %v487 = vadd.f32 %v477, %v485
  %v488 = vtanh.pop %v487
  %490 = vrot.lane.b32.xlu0 %v488, 64
  %v491 = vpop.permute.xlu0 %490
  %v493 = vmul.f32 %v476, %v491
  %s494 = scalar_lea.vmem [#allocation2], 24
  %v495 = vld [vmem:[%s494] sm:$0xff]
  %497 = vrot.lane.b32.xlu0 %v493, 32
  %v498 = vpop.permute.xlu0 %497
  %v499 = vsel %vm188, %v498, 0
  %501 = vmatprep.subr.mxu0 0.0
  %502 = vmatpush1.msra.mxu0 %v183
  %503 = vmatprep.subr.mxu0 0.0
  %504 = vmatpush1.msra.mxu0 %v184
  %505 = vmatprep.subr.mxu0 0.0
  %506 = vmatpush1.msra.mxu0 %v185
  %507 = vmatprep.subr.mxu0 0.0
  %508 = vmatpush1.msra.mxu0 %v186
  %509 = vmatprep.subr.mxu0 0.0
  %510 = vmatpush1.msra.mxu0 0.0
  %511 = vmatprep.subr.mxu0 0.0
  %512 = vmatpush1.msra.mxu0 0.0
  %513 = vmatprep.subr.mxu0 0.0
  %514 = vmatpush1.msra.mxu0 0.0
  %515 = vmatprep.subr.mxu0 0.0
  %516 = vmatpush1.msra.mxu0 0.0
  %517 = vmatprep.subr.mxu0 0.0
  %518 = vmatpush1.msra.mxu0 0.0
  %519 = vmatprep.subr.mxu0 0.0
  %520 = vmatpush1.msra.mxu0 0.0
  %521 = vmatprep.subr.mxu0 0.0
  %522 = vmatpush1.msra.mxu0 0.0
  %523 = vmatprep.subr.mxu0 0.0
  %524 = vmatpush1.msra.mxu0 0.0
  %525 = vmatprep.subr.mxu0 0.0
  %526 = vmatpush1.msra.mxu0 0.0
  %527 = vmatprep.subr.mxu0 0.0
  %528 = vmatpush1.msra.mxu0 0.0
  %529 = vmatprep.subr.mxu0 0.0
  %530 = vmatpush1.msra.mxu0 0.0
  %531 = vmatprep.subr.mxu0 0.0
  %532 = vmatpush1.msra.mxu0 0.0
  %533 = vmatprep.subr.mxu0 0.0
  %534 = vmatpush1.msra.mxu0 0.0
  %535 = vmatprep.subr.mxu0 0.0
  %536 = vmatpush1.msra.mxu0 0.0
  %537 = vmatprep.subr.mxu0 0.0
  %538 = vmatpush1.msra.mxu0 0.0
  %539 = vmatprep.subr.mxu0 0.0
  %540 = vmatpush1.msra.mxu0 0.0
  %541 = vmatprep.subr.mxu0 0.0
  %542 = vmatpush1.msra.mxu0 0.0
  %543 = vmatprep.subr.mxu0 0.0
  %544 = vmatpush1.msra.mxu0 0.0
  %545 = vmatprep.subr.mxu0 0.0
  %546 = vmatpush1.msra.mxu0 0.0
  %547 = vmatprep.subr.mxu0 0.0
  %548 = vmatpush1.msra.mxu0 0.0
  %549 = vmatprep.subr.mxu0 0.0
  %550 = vmatpush1.msra.mxu0 0.0
  %551 = vmatprep.subr.mxu0 0.0
  %552 = vmatpush1.msra.mxu0 0.0
  %553 = vmatprep.subr.mxu0 0.0
  %554 = vmatpush1.msra.mxu0 0.0
  %555 = vmatprep.subr.mxu0 0.0
  %556 = vmatpush1.msra.mxu0 0.0
  %557 = vmatprep.subr.mxu0 0.0
  %558 = vmatpush1.msra.mxu0 0.0
  %559 = vmatprep.subr.mxu0 0.0
  %560 = vmatpush1.msra.mxu0 0.0
  %561 = vmatprep.subr.mxu0 0.0
  %562 = vmatpush1.msra.mxu0 0.0
  %563 = vmatprep.subr.mxu0 0.0
  %564 = vmatpush1.msra.mxu0 0.0
  %565 = vmatprep.mubr.f32.mxu0 0.0
  %566 = vmatmul.mubr.f32.gmra.mrb[0].mxu0 %v499
  %v567 = vpop.f32.mrb[0].mxu0
  %v568 = vadd.f32 0.0, %v567
  %v569 = vpop.f32.mrb[0].mxu0
  %570 = vdwg.mxu0
  %v571 = vadd.f32 %v495, %v568
  %v572 = vxor.u32 %v571, 2147483648
  %v573 = vmul.f32 %v572, 1.442695
  %v574 = vpow.pop %v573
  %v575 = vadd.f32 %v574, 1.0
  %v576 = vrcp.pop %v575
  %v577 = vmul.f32 1.0, %v576
  %v578 = vtanh.pop %v571
  %v579 = vsel %vm182, %v578, %v577
  %v580 = vmul.f32 %v579, %v487
  %582 = vrot.lane.b32.xlu0 %v579, 64
  %v583 = vpop.permute.xlu0 %582
  %v585 = vmul.f32 %v579, %v583
  %587 = vrot.lane.b32.xlu0 %v585, 32
  %v588 = vpop.permute.xlu0 %587
  %v590 = vadd.f32 %v580, %v588
  %v591 = vtanh.pop %v590
  %593 = vrot.lane.b32.xlu0 %v591, 64
  %v594 = vpop.permute.xlu0 %593
  %v596 = vmul.f32 %v579, %v594
  %s597 = scalar_lea.vmem [#allocation2], 32
  %v598 = vld [vmem:[%s597] sm:$0xff]
  %600 = vrot.lane.b32.xlu0 %v596, 32
  %v601 = vpop.permute.xlu0 %600
  %v602 = vsel %vm188, %v601, 0
  %604 = vmatprep.subr.mxu0 0.0
  %605 = vmatpush1.msra.mxu0 %v183
  %606 = vmatprep.subr.mxu0 0.0
  %607 = vmatpush1.msra.mxu0 %v184
  %608 = vmatprep.subr.mxu0 0.0
  %609 = vmatpush1.msra.mxu0 %v185
  %610 = vmatprep.subr.mxu0 0.0
  %611 = vmatpush1.msra.mxu0 %v186
  %612 = vmatprep.subr.mxu0 0.0
  %613 = vmatpush1.msra.mxu0 0.0
  %614 = vmatprep.subr.mxu0 0.0
  %615 = vmatpush1.msra.mxu0 0.0
  %616 = vmatprep.subr.mxu0 0.0
  %617 = vmatpush1.msra.mxu0 0.0
  %618 = vmatprep.subr.mxu0 0.0
  %619 = vmatpush1.msra.mxu0 0.0
  %620 = vmatprep.subr.mxu0 0.0
  %621 = vmatpush1.msra.mxu0 0.0
  %622 = vmatprep.subr.mxu0 0.0
  %623 = vmatpush1.msra.mxu0 0.0
  %624 = vmatprep.subr.mxu0 0.0
  %625 = vmatpush1.msra.mxu0 0.0
  %626 = vmatprep.subr.mxu0 0.0
  %627 = vmatpush1.msra.mxu0 0.0
  %628 = vmatprep.subr.mxu0 0.0
  %629 = vmatpush1.msra.mxu0 0.0
  %630 = vmatprep.subr.mxu0 0.0
  %631 = vmatpush1.msra.mxu0 0.0
  %632 = vmatprep.subr.mxu0 0.0
  %633 = vmatpush1.msra.mxu0 0.0
  %634 = vmatprep.subr.mxu0 0.0
  %635 = vmatpush1.msra.mxu0 0.0
  %636 = vmatprep.subr.mxu0 0.0
  %637 = vmatpush1.msra.mxu0 0.0
  %638 = vmatprep.subr.mxu0 0.0
  %639 = vmatpush1.msra.mxu0 0.0
  %640 = vmatprep.subr.mxu0 0.0
  %641 = vmatpush1.msra.mxu0 0.0
  %642 = vmatprep.subr.mxu0 0.0
  %643 = vmatpush1.msra.mxu0 0.0
  %644 = vmatprep.subr.mxu0 0.0
  %645 = vmatpush1.msra.mxu0 0.0
  %646 = vmatprep.subr.mxu0 0.0
  %647 = vmatpush1.msra.mxu0 0.0
  %648 = vmatprep.subr.mxu0 0.0
  %649 = vmatpush1.msra.mxu0 0.0
  %650 = vmatprep.subr.mxu0 0.0
  %651 = vmatpush1.msra.mxu0 0.0
  %652 = vmatprep.subr.mxu0 0.0
  %653 = vmatpush1.msra.mxu0 0.0
  %654 = vmatprep.subr.mxu0 0.0
  %655 = vmatpush1.msra.mxu0 0.0
  %656 = vmatprep.subr.mxu0 0.0
  %657 = vmatpush1.msra.mxu0 0.0
  %658 = vmatprep.subr.mxu0 0.0
  %659 = vmatpush1.msra.mxu0 0.0
  %660 = vmatprep.subr.mxu0 0.0
  %661 = vmatpush1.msra.mxu0 0.0
  %662 = vmatprep.subr.mxu0 0.0
  %663 = vmatpush1.msra.mxu0 0.0
  %664 = vmatprep.subr.mxu0 0.0
  %665 = vmatpush1.msra.mxu0 0.0
  %666 = vmatprep.subr.mxu0 0.0
  %667 = vmatpush1.msra.mxu0 0.0
  %668 = vmatprep.mubr.f32.mxu0 0.0
  %669 = vmatmul.mubr.f32.gmra.mrb[0].mxu0 %v602
  %v670 = vpop.f32.mrb[0].mxu0
  %v671 = vadd.f32 0.0, %v670
  %v672 = vpop.f32.mrb[0].mxu0
  %673 = vdwg.mxu0
  %v674 = vadd.f32 %v598, %v671
  %v675 = vxor.u32 %v674, 2147483648
  %v676 = vmul.f32 %v675, 1.442695
  %v677 = vpow.pop %v676
  %v678 = vadd.f32 %v677, 1.0
  %v679 = vrcp.pop %v678
  %v680 = vmul.f32 1.0, %v679
  %v681 = vtanh.pop %v674
  %v682 = vsel %vm182, %v681, %v680
  %v683 = vmul.f32 %v682, %v590
  %685 = vrot.lane.b32.xlu0 %v682, 64
  %v686 = vpop.permute.xlu0 %685
  %v688 = vmul.f32 %v682, %v686
  %690 = vrot.lane.b32.xlu0 %v688, 32
  %v691 = vpop.permute.xlu0 %690
  %v693 = vadd.f32 %v683, %v691
  %v694 = vtanh.pop %v693
  %696 = vrot.lane.b32.xlu0 %v694, 64
  %v697 = vpop.permute.xlu0 %696
  %v699 = vmul.f32 %v682, %v697
  %s700 = scalar_lea.vmem [#allocation2], 40
  %v701 = vld [vmem:[%s700] sm:$0xff]
  %703 = vrot.lane.b32.xlu0 %v699, 32
  %v704 = vpop.permute.xlu0 %703
  %v705 = vsel %vm188, %v704, 0
  %707 = vmatprep.subr.mxu0 0.0
  %708 = vmatpush1.msra.mxu0 %v183
  %709 = vmatprep.subr.mxu0 0.0
  %710 = vmatpush1.msra.mxu0 %v184
  %711 = vmatprep.subr.mxu0 0.0
  %712 = vmatpush1.msra.mxu0 %v185
  %713 = vmatprep.subr.mxu0 0.0
  %714 = vmatpush1.msra.mxu0 %v186
  %715 = vmatprep.subr.mxu0 0.0
  %716 = vmatpush1.msra.mxu0 0.0
  %717 = vmatprep.subr.mxu0 0.0
  %718 = vmatpush1.msra.mxu0 0.0
  %719 = vmatprep.subr.mxu0 0.0
  %720 = vmatpush1.msra.mxu0 0.0
  %721 = vmatprep.subr.mxu0 0.0
  %722 = vmatpush1.msra.mxu0 0.0
  %723 = vmatprep.subr.mxu0 0.0
  %724 = vmatpush1.msra.mxu0 0.0
  %725 = vmatprep.subr.mxu0 0.0
  %726 = vmatpush1.msra.mxu0 0.0
  %727 = vmatprep.subr.mxu0 0.0
  %728 = vmatpush1.msra.mxu0 0.0
  %729 = vmatprep.subr.mxu0 0.0
  %730 = vmatpush1.msra.mxu0 0.0
  %731 = vmatprep.subr.mxu0 0.0
  %732 = vmatpush1.msra.mxu0 0.0
  %733 = vmatprep.subr.mxu0 0.0
  %734 = vmatpush1.msra.mxu0 0.0
  %735 = vmatprep.subr.mxu0 0.0
  %736 = vmatpush1.msra.mxu0 0.0
  %737 = vmatprep.subr.mxu0 0.0
  %738 = vmatpush1.msra.mxu0 0.0
  %739 = vmatprep.subr.mxu0 0.0
  %740 = vmatpush1.msra.mxu0 0.0
  %741 = vmatprep.subr.mxu0 0.0
  %742 = vmatpush1.msra.mxu0 0.0
  %743 = vmatprep.subr.mxu0 0.0
  %744 = vmatpush1.msra.mxu0 0.0
  %745 = vmatprep.subr.mxu0 0.0
  %746 = vmatpush1.msra.mxu0 0.0
  %747 = vmatprep.subr.mxu0 0.0
  %748 = vmatpush1.msra.mxu0 0.0
  %749 = vmatprep.subr.mxu0 0.0
  %750 = vmatpush1.msra.mxu0 0.0
  %751 = vmatprep.subr.mxu0 0.0
  %752 = vmatpush1.msra.mxu0 0.0
  %753 = vmatprep.subr.mxu0 0.0
  %754 = vmatpush1.msra.mxu0 0.0
  %755 = vmatprep.subr.mxu0 0.0
  %756 = vmatpush1.msra.mxu0 0.0
  %757 = vmatprep.subr.mxu0 0.0
  %758 = vmatpush1.msra.mxu0 0.0
  %759 = vmatprep.subr.mxu0 0.0
  %760 = vmatpush1.msra.mxu0 0.0
  %761 = vmatprep.subr.mxu0 0.0
  %762 = vmatpush1.msra.mxu0 0.0
  %763 = vmatprep.subr.mxu0 0.0
  %764 = vmatpush1.msra.mxu0 0.0
  %765 = vmatprep.subr.mxu0 0.0
  %766 = vmatpush1.msra.mxu0 0.0
  %767 = vmatprep.subr.mxu0 0.0
  %768 = vmatpush1.msra.mxu0 0.0
  %769 = vmatprep.subr.mxu0 0.0
  %770 = vmatpush1.msra.mxu0 0.0
  %771 = vmatprep.mubr.f32.mxu0 0.0
  %772 = vmatmul.mubr.f32.gmra.mrb[0].mxu0 %v705
  %v773 = vpop.f32.mrb[0].mxu0
  %v774 = vadd.f32 0.0, %v773
  %v775 = vpop.f32.mrb[0].mxu0
  %776 = vdwg.mxu0
  %v777 = vadd.f32 %v701, %v774
  %v778 = vxor.u32 %v777, 2147483648
  %v779 = vmul.f32 %v778, 1.442695
  %v780 = vpow.pop %v779
  %v781 = vadd.f32 %v780, 1.0
  %v782 = vrcp.pop %v781
  %v783 = vmul.f32 1.0, %v782
  %v784 = vtanh.pop %v777
  %v785 = vsel %vm182, %v784, %v783
  %v786 = vmul.f32 %v785, %v693
  %788 = vrot.lane.b32.xlu0 %v785, 64
  %v789 = vpop.permute.xlu0 %788
  %v791 = vmul.f32 %v785, %v789
  %793 = vrot.lane.b32.xlu0 %v791, 32
  %v794 = vpop.permute.xlu0 %793
  %v796 = vadd.f32 %v786, %v794
  %v797 = vtanh.pop %v796
  %799 = vrot.lane.b32.xlu0 %v797, 64
  %v800 = vpop.permute.xlu0 %799
  %v802 = vmul.f32 %v785, %v800
  %s803 = scalar_lea.vmem [#allocation2], 48
  %v804 = vld [vmem:[%s803] sm:$0xff]
  %806 = vrot.lane.b32.xlu0 %v802, 32
  %v807 = vpop.permute.xlu0 %806
  %v808 = vsel %vm188, %v807, 0
  %810 = vmatprep.subr.mxu0 0.0
  %811 = vmatpush1.msra.mxu0 %v183
  %812 = vmatprep.subr.mxu0 0.0
  %813 = vmatpush1.msra.mxu0 %v184
  %814 = vmatprep.subr.mxu0 0.0
  %815 = vmatpush1.msra.mxu0 %v185
  %816 = vmatprep.subr.mxu0 0.0
  %817 = vmatpush1.msra.mxu0 %v186
  %818 = vmatprep.subr.mxu0 0.0
  %819 = vmatpush1.msra.mxu0 0.0
  %820 = vmatprep.subr.mxu0 0.0
  %821 = vmatpush1.msra.mxu0 0.0
  %822 = vmatprep.subr.mxu0 0.0
  %823 = vmatpush1.msra.mxu0 0.0
  %824 = vmatprep.subr.mxu0 0.0
  %825 = vmatpush1.msra.mxu0 0.0
  %826 = vmatprep.subr.mxu0 0.0
  %827 = vmatpush1.msra.mxu0 0.0
  %828 = vmatprep.subr.mxu0 0.0
  %829 = vmatpush1.msra.mxu0 0.0
  %830 = vmatprep.subr.mxu0 0.0
  %831 = vmatpush1.msra.mxu0 0.0
  %832 = vmatprep.subr.mxu0 0.0
  %833 = vmatpush1.msra.mxu0 0.0
  %834 = vmatprep.subr.mxu0 0.0
  %835 = vmatpush1.msra.mxu0 0.0
  %836 = vmatprep.subr.mxu0 0.0
  %837 = vmatpush1.msra.mxu0 0.0
  %838 = vmatprep.subr.mxu0 0.0
  %839 = vmatpush1.msra.mxu0 0.0
  %840 = vmatprep.subr.mxu0 0.0
  %841 = vmatpush1.msra.mxu0 0.0
  %842 = vmatprep.subr.mxu0 0.0
  %843 = vmatpush1.msra.mxu0 0.0
  %844 = vmatprep.subr.mxu0 0.0
  %845 = vmatpush1.msra.mxu0 0.0
  %846 = vmatprep.subr.mxu0 0.0
  %847 = vmatpush1.msra.mxu0 0.0
  %848 = vmatprep.subr.mxu0 0.0
  %849 = vmatpush1.msra.mxu0 0.0
  %850 = vmatprep.subr.mxu0 0.0
  %851 = vmatpush1.msra.mxu0 0.0
  %852 = vmatprep.subr.mxu0 0.0
  %853 = vmatpush1.msra.mxu0 0.0
  %854 = vmatprep.subr.mxu0 0.0
  %855 = vmatpush1.msra.mxu0 0.0
  %856 = vmatprep.subr.mxu0 0.0
  %857 = vmatpush1.msra.mxu0 0.0
  %858 = vmatprep.subr.mxu0 0.0
  %859 = vmatpush1.msra.mxu0 0.0
  %860 = vmatprep.subr.mxu0 0.0
  %861 = vmatpush1.msra.mxu0 0.0
  %862 = vmatprep.subr.mxu0 0.0
  %863 = vmatpush1.msra.mxu0 0.0
  %864 = vmatprep.subr.mxu0 0.0
  %865 = vmatpush1.msra.mxu0 0.0
  %866 = vmatprep.subr.mxu0 0.0
  %867 = vmatpush1.msra.mxu0 0.0
  %868 = vmatprep.subr.mxu0 0.0
  %869 = vmatpush1.msra.mxu0 0.0
  %870 = vmatprep.subr.mxu0 0.0
  %871 = vmatpush1.msra.mxu0 0.0
  %872 = vmatprep.subr.mxu0 0.0
  %873 = vmatpush1.msra.mxu0 0.0
  %874 = vmatprep.mubr.f32.mxu0 0.0
  %875 = vmatmul.mubr.f32.gmra.mrb[0].mxu0 %v808
  %v876 = vpop.f32.mrb[0].mxu0
  %v877 = vadd.f32 0.0, %v876
  %v878 = vpop.f32.mrb[0].mxu0
  %879 = vdwg.mxu0
  %v880 = vadd.f32 %v804, %v877
  %v881 = vxor.u32 %v880, 2147483648
  %v882 = vmul.f32 %v881, 1.442695
  %v883 = vpow.pop %v882
  %v884 = vadd.f32 %v883, 1.0
  %v885 = vrcp.pop %v884
  %v886 = vmul.f32 1.0, %v885
  %v887 = vtanh.pop %v880
  %v888 = vsel %vm182, %v887, %v886
  %v889 = vmul.f32 %v888, %v796
  %891 = vrot.lane.b32.xlu0 %v888, 64
  %v892 = vpop.permute.xlu0 %891
  %v894 = vmul.f32 %v888, %v892
  %896 = vrot.lane.b32.xlu0 %v894, 32
  %v897 = vpop.permute.xlu0 %896
  %v899 = vadd.f32 %v889, %v897
  %v900 = vtanh.pop %v899
  %902 = vrot.lane.b32.xlu0 %v900, 64
  %v903 = vpop.permute.xlu0 %902
  %v905 = vmul.f32 %v888, %v903
  %s906 = scalar_lea.vmem [#allocation2], 56
  %v907 = vld [vmem:[%s906] sm:$0xff]
  %909 = vrot.lane.b32.xlu0 %v905, 32
  %v910 = vpop.permute.xlu0 %909
  %v911 = vsel %vm188, %v910, 0
  %913 = vmatprep.subr.mxu0 0.0
  %914 = vmatpush1.msra.mxu0 %v183
  %915 = vmatprep.subr.mxu0 0.0
  %916 = vmatpush1.msra.mxu0 %v184
  %917 = vmatprep.subr.mxu0 0.0
  %918 = vmatpush1.msra.mxu0 %v185
  %919 = vmatprep.subr.mxu0 0.0
  %920 = vmatpush1.msra.mxu0 %v186
  %921 = vmatprep.subr.mxu0 0.0
  %922 = vmatpush1.msra.mxu0 0.0
  %923 = vmatprep.subr.mxu0 0.0
  %924 = vmatpush1.msra.mxu0 0.0
  %925 = vmatprep.subr.mxu0 0.0
  %926 = vmatpush1.msra.mxu0 0.0
  %927 = vmatprep.subr.mxu0 0.0
  %928 = vmatpush1.msra.mxu0 0.0
  %929 = vmatprep.subr.mxu0 0.0
  %930 = vmatpush1.msra.mxu0 0.0
  %931 = vmatprep.subr.mxu0 0.0
  %932 = vmatpush1.msra.mxu0 0.0
  %933 = vmatprep.subr.mxu0 0.0
  %934 = vmatpush1.msra.mxu0 0.0
  %935 = vmatprep.subr.mxu0 0.0
  %936 = vmatpush1.msra.mxu0 0.0
  %937 = vmatprep.subr.mxu0 0.0
  %938 = vmatpush1.msra.mxu0 0.0
  %939 = vmatprep.subr.mxu0 0.0
  %940 = vmatpush1.msra.mxu0 0.0
  %941 = vmatprep.subr.mxu0 0.0
  %942 = vmatpush1.msra.mxu0 0.0
  %943 = vmatprep.subr.mxu0 0.0
  %944 = vmatpush1.msra.mxu0 0.0
  %945 = vmatprep.subr.mxu0 0.0
  %946 = vmatpush1.msra.mxu0 0.0
  %947 = vmatprep.subr.mxu0 0.0
  %948 = vmatpush1.msra.mxu0 0.0
  %949 = vmatprep.subr.mxu0 0.0
  %950 = vmatpush1.msra.mxu0 0.0
  %951 = vmatprep.subr.mxu0 0.0
  %952 = vmatpush1.msra.mxu0 0.0
  %953 = vmatprep.subr.mxu0 0.0
  %954 = vmatpush1.msra.mxu0 0.0
  %955 = vmatprep.subr.mxu0 0.0
  %956 = vmatpush1.msra.mxu0 0.0
  %957 = vmatprep.subr.mxu0 0.0
  %958 = vmatpush1.msra.mxu0 0.0
  %959 = vmatprep.subr.mxu0 0.0
  %960 = vmatpush1.msra.mxu0 0.0
  %961 = vmatprep.subr.mxu0 0.0
  %962 = vmatpush1.msra.mxu0 0.0
  %963 = vmatprep.subr.mxu0 0.0
  %964 = vmatpush1.msra.mxu0 0.0
  %965 = vmatprep.subr.mxu0 0.0
  %966 = vmatpush1.msra.mxu0 0.0
  %967 = vmatprep.subr.mxu0 0.0
  %968 = vmatpush1.msra.mxu0 0.0
  %969 = vmatprep.subr.mxu0 0.0
  %970 = vmatpush1.msra.mxu0 0.0
  %971 = vmatprep.subr.mxu0 0.0
  %972 = vmatpush1.msra.mxu0 0.0
  %973 = vmatprep.subr.mxu0 0.0
  %974 = vmatpush1.msra.mxu0 0.0
  %975 = vmatprep.subr.mxu0 0.0
  %976 = vmatpush1.msra.mxu0 0.0
  %977 = vmatprep.mubr.f32.mxu0 0.0
  %978 = vmatmul.mubr.f32.gmra.mrb[0].mxu0 %v911
  %v979 = vpop.f32.mrb[0].mxu0
  %v980 = vadd.f32 0.0, %v979
  %v981 = vpop.f32.mrb[0].mxu0
  %982 = vdwg.mxu0
  %v983 = vadd.f32 %v907, %v980
  %v984 = vxor.u32 %v983, 2147483648
  %v985 = vmul.f32 %v984, 1.442695
  %v986 = vpow.pop %v985
  %v987 = vadd.f32 %v986, 1.0
  %v988 = vrcp.pop %v987
  %v989 = vmul.f32 1.0, %v988
  %v990 = vtanh.pop %v983
  %v991 = vsel %vm182, %v990, %v989
  %v992 = vmul.f32 %v991, %v899
  %994 = vrot.lane.b32.xlu0 %v991, 64
  %v995 = vpop.permute.xlu0 %994
  %v997 = vmul.f32 %v991, %v995
  %999 = vrot.lane.b32.xlu0 %v997, 32
  %v1000 = vpop.permute.xlu0 %999
  %v1002 = vadd.f32 %v992, %v1000
  %v1003 = vtanh.pop %v1002
  %1005 = vrot.lane.b32.xlu0 %v1003, 64
  %v1006 = vpop.permute.xlu0 %1005
  %v1008 = vmul.f32 %v991, %v1006
  %v1009 = vld [vmem:[%s4] sm:$0x1]
  %v1011 = vlaneseq
  %v1012 = vshrl.u32 %v1011, 7
  %v1013 = vsub.s32 0, %v1012
  %v1014 = vrot.slane %v1009, %v1013
  %1015 = vrot.lane.b32.xlu0 %v1014, 96
  %v1016 = vpop.permute.xlu0 %1015
  %v1018 = vmul.f32 %v1008, %v1016
  %1020 = vrot.lane.b32.xlu0 %v1018, 32
  %v1021 = vpop.permute.xlu0 %1020
  %v1023 = vsel %vm188, %v1021, 0.0
  %1024 = vadd.xlane.f32.xlu0 %v1023
  %v1025 = vpop.xlane.xlu0 %1024
  %1026 = vst [vmem:[%s5] sm:$0xff] %v1025
  // Predicated region
  $region22: #{shallow_regression_lstm_forward.1} parent=0 // pred_check
    _
  $region23: #{shallow_regression_lstm_forward.1} parent=0 // pred_check_branch
    %1028 = sbr.rel (0) target = $region25
  $region24: #{shallow_regression_lstm_forward.1} parent=0 // pred_region
    _
  $region25: #{shallow_regression_lstm_forward.1} parent=0 // pred_fallthru
    _
  // Predicated region
  $region26: #{shallow_regression_lstm_forward.1} parent=0 // pred_check
    _
  $region27: #{shallow_regression_lstm_forward.1} parent=0 // pred_check_branch
    %1030 = sbr.rel (0) target = $region29
  $region28: #{shallow_regression_lstm_forward.1} parent=0 // pred_region
    _
  $region29: #{shallow_regression_lstm_forward.1} parent=0 // pred_fallthru
    _

</llo_original>
